<compile_context>
chip_gen: v7x
topology: tpu7x:2x2x1
jax: 0.10.0
libtpu: 0.0.40
codegen_flags: <defaults>
</compile_context>

<pallas_src>
import functools

import jax
import jax.numpy as jnp
from jax.experimental import pallas as pl
from jax.experimental.pallas import tpu as pltpu


def _round_up(x, m):
    return ((x + m - 1) // m) * m


def mlp_critic_kernel(x_ref, w1t_ref, b1_ref, w2t_ref, b2_ref, w3_ref, b3_ref,
                      o_ref):
    """Fused 3-layer MLP for one (TM, obs_dim) batch tile, feature-major.

    x_ref:   (TM, obs_dim)  MXU dtype (bf16 or f32)  -- natural obs layout
    w1t_ref: (H1, obs_dim)  MXU dtype                -- layer-1 weight (transposed)
    b1_ref:  (H1, 1)        f32
    w2t_ref: (H2, H1)       MXU dtype                -- layer-2 weight (transposed)
    b2_ref:  (H2, 1)        f32
    w3_ref:  (1, H2)        f32                      -- layer-3 weight row
    b3_ref:  (1, 1)         f32
    o_ref:   (1, TM)        f32                      -- lane-dense output row
    """
    # Layer 1: contract obs_dim of (H1, obs_dim) against obs_dim of
    # (TM, obs_dim) -> (H1, TM).  q@k^T-style contraction: obs needs no
    # transpose and the result already has the batch on lanes, so every
    # elementwise op below is fully lane-dense.
    h1 = jax.lax.dot_general(
        w1t_ref[...], x_ref[...],
        dimension_numbers=(((1,), (1,)), ((), ())),
        preferred_element_type=jnp.float32)
    h1 = jnp.tanh(h1 + b1_ref[...])                       # (H1, TM), f32

    # Layer 2: plain matmul (H2, H1) @ (H1, TM) -> (H2, TM).
    h2 = jnp.dot(w2t_ref[...], h1.astype(w2t_ref.dtype),
                 preferred_element_type=jnp.float32)
    h2 = jnp.tanh(h2 + b2_ref[...])                       # (H2, TM), f32

    # Layer 3: plain matmul (1, H2) @ (H2, TM) -> (1, TM); already in the
    # lane-dense output layout, so the store is a full-width vst.
    v = jnp.dot(w3_ref[...], h2, preferred_element_type=jnp.float32)
    o_ref[...] = (v + b3_ref[...]).astype(o_ref.dtype)


def _vmem_capacity_bytes():
    """Per-TensorCore VMEM capacity; conservative fallback if the query fails."""
    try:
        return int(pltpu.get_tpu_info().vmem_capacity_bytes)
    except Exception:
        return 64 << 20   # v7x-sized fallback (smallest current generation)


def _pick_tile(batch, obs_dim, h1_dim, h2_dim, mxu_itemsize, block_b):
    """Pick (tm, vmem_limit_bytes) from the actual padded per-tile footprint."""
    vmem_cap = _vmem_capacity_bytes()
    # Scoped-VMEM limit: ~75% of physical capacity (48 MiB on v7x, 96 MiB on
    # v5e/v6e), never below the 32 MiB default.
    vmem_limit = max(min(int(0.75 * vmem_cap), 96 << 20), 32 << 20)

    # --- per-batch-row VMEM bytes (lane/sublane-padded, double-buffered) -----
    in_bpr = 2 * _round_up(obs_dim, 128) * mxu_itemsize         # obs tile x2 bufs
    out_bpr = 2 * 8 * 4                                         # (1->8, tm) f32 x2
    act_bpr = 2 * (_round_up(h1_dim, 8) + _round_up(h2_dim, 8)) * 4  # f32 h1/h2 + casts
    per_row = ((in_bpr + out_bpr + act_bpr) * 3) // 2           # 1.5x safety factor

    # --- resident weights/biases (padded, x2 pipeline buffers) ---------------
    sub_mxu = max(8, 32 // mxu_itemsize)
    resident = 2 * (
        _round_up(h1_dim, sub_mxu) * _round_up(obs_dim, 128) * mxu_itemsize   # w1^T
        + _round_up(h2_dim, sub_mxu) * _round_up(h1_dim, 128) * mxu_itemsize  # w2^T
        + _round_up(h1_dim, 8) * 128 * 4                                      # b1
        + _round_up(h2_dim, 8) * 128 * 4                                      # b2
        + 8 * _round_up(h2_dim, 128) * 4                                      # w3 row
        + 8 * 128 * 4)                                                        # b3
    margin = 2 << 20   # Mosaic-internal scratch headroom

    budget = int(0.8 * vmem_limit) - resident - margin
    tm_cap = max((budget // per_row) // 128 * 128, 128)

    # Generation-aware hard cap: 8192 rows on 64 MiB parts (v7x),
    # 16384 rows on 128 MiB parts (v5e/v6e).
    tm_cap = min(tm_cap, 16384 if vmem_cap >= (96 << 20) else 8192)

    # >=4 grid steps when the batch allows it: keeps both v7x TensorCores fed
    # (>=2 steps each for double-buffering) and bounds padding waste.
    tm_steps = max(_round_up(pl.cdiv(batch, 4), 128), 128)

    tm = min(tm_cap, tm_steps)
    if block_b is not None:
        tm = min(tm, max(_round_up(int(block_b), 128), 128))
    return tm, vmem_limit


@functools.partial(jax.jit, static_argnames=("block_b", "mxu_dtype"))
def mlp_critic_forward(obs, params, *, block_b=None, mxu_dtype=jnp.bfloat16):
    """obs: (B, obs_dim) -> (B,) critic values."""
    w1, b1, w2, b2, w3, b3 = params
    B, obs_dim = obs.shape
    h1_dim = w1.shape[1]
    h2_dim = w2.shape[1]

    mxu_itemsize = jnp.dtype(mxu_dtype).itemsize
    tm, vmem_limit = _pick_tile(B, obs_dim, h1_dim, h2_dim, mxu_itemsize, block_b)
    B_pad = _round_up(B, tm)
    grid = (B_pad // tm,)

    # Operand prep: obs + hidden weights feed the MXU (bf16 by default to halve
    # the dominant obs traffic); biases / final layer stay f32.  Weights are
    # stored transposed (out_features, in_features) so every layer is either a
    # plain matmul or a q@k^T-style contraction -- no in-kernel transposes of
    # the big (TM, .) operands.
    obs_c = obs.astype(mxu_dtype)
    w1t = w1.T.astype(mxu_dtype)                            # (H1, obs_dim)
    w2t = w2.T.astype(mxu_dtype)                            # (H2, H1)
    b1c = b1.astype(jnp.float32).reshape(h1_dim, 1)         # (H1, 1)
    b2c = b2.astype(jnp.float32).reshape(h2_dim, 1)         # (H2, 1)
    w3r = w3.astype(jnp.float32).reshape(1, h2_dim)         # (1, H2)
    b3c = b3.astype(jnp.float32).reshape(1, 1)              # (1, 1)

    if B_pad != B:
        obs_c = jnp.pad(obs_c, ((0, B_pad - B), (0, 0)))

    const = lambda i: (0, 0)   # weights/biases: VMEM-resident across all steps

    out = pl.pallas_call(
        mlp_critic_kernel,
        out_shape=jax.ShapeDtypeStruct((1, B_pad), jnp.float32),
        grid=grid,
        in_specs=[
            pl.BlockSpec((tm, obs_dim), lambda i: (i, 0)),   # obs: batch-tiled
            pl.BlockSpec(w1t.shape, const),
            pl.BlockSpec(b1c.shape, const),
            pl.BlockSpec(w2t.shape, const),
            pl.BlockSpec(b2c.shape, const),
            pl.BlockSpec(w3r.shape, const),
            pl.BlockSpec(b3c.shape, const),
        ],
        out_specs=pl.BlockSpec((1, tm), lambda i: (0, i)),   # lane-dense row
        compiler_params=pltpu.CompilerParams(
            dimension_semantics=("parallel",),
            vmem_limit_bytes=int(vmem_limit),
        ),
    )(obs_c, w1t, b1c, w2t, b2c, w3r, b3c)

    # (1, B_pad) -> (B,): the squeeze is folded into this slice.
    return out[0, :B]


def init_params(key, obs_dim, hidden_sizes):
    """Deterministic init (uniform, PyTorch-Linear-like fan-in scaling).

    Weights stored as (in_features, out_features); biases as (1, out_features).
    """
    sizes = [obs_dim] + list(hidden_sizes) + [1]
    params = []
    for j in range(len(sizes) - 1):
        fan_in, fan_out = sizes[j], sizes[j + 1]
        key, kw, kb = jax.random.split(key, 3)
        bound = 1.0 / (fan_in ** 0.5)
        w = jax.random.uniform(kw, (fan_in, fan_out), jnp.float32, -bound, bound)
        b = jax.random.uniform(kb, (1, fan_out), jnp.float32, -bound, bound)
        params += [w, b]
    return tuple(params)


def reference_forward(obs, params):
    """Plain-JAX reference of the PyTorch module."""
    w1, b1, w2, b2, w3, b3 = params
    h = jnp.tanh(obs @ w1 + b1)
    h = jnp.tanh(h @ w2 + b2)
    v = h @ w3 + b3
    return jnp.squeeze(v, -1)


if __name__ == "__main__":
    key = jax.random.PRNGKey(0)
    obs_dim, hidden_sizes = 16, (32, 32)

    key, k_obs = jax.random.split(key)
    params = init_params(key, obs_dim, hidden_sizes)

    # Small batch (pads to one 128-row tile), f32 MXU path: tight tolerance.
    obs_small = jax.random.normal(k_obs, (8, obs_dim), jnp.float32)
    v_small = jax.block_until_ready(
        mlp_critic_forward(obs_small, params, mxu_dtype=jnp.float32))
    v_small_ref = reference_forward(obs_small, params)
    assert v_small.shape == (8,)
    assert jnp.allclose(v_small, v_small_ref, atol=1e-5, rtol=1e-5)

    # Non-multiple batch: exercises the multi-step batch grid (2x128) + padding.
    key, k_obs2 = jax.random.split(key)
    obs_big = jax.random.normal(k_obs2, (200, obs_dim), jnp.float32)
    v_big = jax.block_until_ready(
        mlp_critic_forward(obs_big, params, mxu_dtype=jnp.float32))
    v_big_ref = reference_forward(obs_big, params)
    assert v_big.shape == (200,)
    assert jnp.allclose(v_big, v_big_ref, atol=1e-5, rtol=1e-5)

    # Default bf16 MXU-operand path (f32 accumulate / bias / tanh): looser tol.
    v_bf16 = jax.block_until_ready(mlp_critic_forward(obs_big, params))
    assert v_bf16.shape == (200,)
    assert jnp.allclose(v_bf16, v_big_ref, atol=5e-2, rtol=5e-2)

    print("KERNEL_OK")
</pallas_src>

<mosaic_0001>
module attributes {stable_mosaic.version = 11 : i64} {
  func.func @mlp_critic_kernel(%arg0: i32, %arg1: memref<128x16xf32, #tpu.memory_space<vmem>>, %arg2: memref<32x16xf32, #tpu.memory_space<vmem>>, %arg3: memref<32x1xf32, #tpu.memory_space<vmem>>, %arg4: memref<32x32xf32, #tpu.memory_space<vmem>>, %arg5: memref<32x1xf32, #tpu.memory_space<vmem>>, %arg6: memref<1x32xf32, #tpu.memory_space<vmem>>, %arg7: memref<1x1xf32, #tpu.memory_space<vmem>>, %arg8: memref<1x128xf32, #tpu.memory_space<vmem>>) attributes {dimension_semantics = [#tpu.dimension_semantics<parallel>], iteration_bounds = array<i64: 1>, scalar_prefetch = 0 : i64, scratch_operands = 0 : i64, tpu.core_type = #tpu.core_type<tc>, window_params = [{transform_indices = @transform_0, window_bounds = array<i64: 128, 16>}, {pipeline_mode = #tpu.pipeline_mode<synchronous>, transform_indices = @transform_1, window_bounds = array<i64: 32, 16>}, {pipeline_mode = #tpu.pipeline_mode<synchronous>, transform_indices = @transform_2, window_bounds = array<i64: 32, 1>}, {pipeline_mode = #tpu.pipeline_mode<synchronous>, transform_indices = @transform_3, window_bounds = array<i64: 32, 32>}, {pipeline_mode = #tpu.pipeline_mode<synchronous>, transform_indices = @transform_4, window_bounds = array<i64: 32, 1>}, {pipeline_mode = #tpu.pipeline_mode<synchronous>, transform_indices = @transform_5, window_bounds = array<i64: 1, 32>}, {pipeline_mode = #tpu.pipeline_mode<synchronous>, transform_indices = @transform_6, window_bounds = array<i64: 1, 1>}, {transform_indices = @transform_7, window_bounds = array<i64: 1, 128>}]} {
    %c0 = arith.constant 0 : index
    %c0_0 = arith.constant 0 : index
    %0 = vector.load %arg2[%c0, %c0_0] : memref<32x16xf32, #tpu.memory_space<vmem>>, vector<32x16xf32>
    %c0_1 = arith.constant 0 : index
    %c0_2 = arith.constant 0 : index
    %1 = vector.load %arg1[%c0_1, %c0_2] : memref<128x16xf32, #tpu.memory_space<vmem>>, vector<128x16xf32>
    %cst = arith.constant dense<0.000000e+00> : vector<32x128xf32>
    %2 = tpu.matmul %0, %1, %cst {dimension_numbers = #tpu.dot_dimension_numbers<[1], [1], [0], [0], [0, 0, 1, 0], [], []>} : vector<32x16xf32>, vector<128x16xf32>, vector<32x128xf32> -> vector<32x128xf32>
    %c0_3 = arith.constant 0 : index
    %c0_4 = arith.constant 0 : index
    %3 = vector.load %arg3[%c0_3, %c0_4] : memref<32x1xf32, #tpu.memory_space<vmem>>, vector<32x1xf32>
    %4 = vector.broadcast %3 : vector<32x1xf32> to vector<32x128xf32>
    %5 = arith.addf %2, %4 : vector<32x128xf32>
    %6 = math.tanh %5 : vector<32x128xf32>
    %c0_5 = arith.constant 0 : index
    %c0_6 = arith.constant 0 : index
    %7 = vector.load %arg4[%c0_5, %c0_6] : memref<32x32xf32, #tpu.memory_space<vmem>>, vector<32x32xf32>
    %cst_7 = arith.constant dense<0.000000e+00> : vector<32x128xf32>
    %8 = tpu.matmul %7, %6, %cst_7 {dimension_numbers = #tpu.dot_dimension_numbers<[1], [0], [0], [1], [0, 0, 1, 1], [], []>} : vector<32x32xf32>, vector<32x128xf32>, vector<32x128xf32> -> vector<32x128xf32>
    %c0_8 = arith.constant 0 : index
    %c0_9 = arith.constant 0 : index
    %9 = vector.load %arg5[%c0_8, %c0_9] : memref<32x1xf32, #tpu.memory_space<vmem>>, vector<32x1xf32>
    %10 = vector.broadcast %9 : vector<32x1xf32> to vector<32x128xf32>
    %11 = arith.addf %8, %10 : vector<32x128xf32>
    %12 = math.tanh %11 : vector<32x128xf32>
    %c0_10 = arith.constant 0 : index
    %c0_11 = arith.constant 0 : index
    %13 = vector.load %arg6[%c0_10, %c0_11] : memref<1x32xf32, #tpu.memory_space<vmem>>, vector<1x32xf32>
    %cst_12 = arith.constant dense<0.000000e+00> : vector<1x128xf32>
    %14 = tpu.matmul %13, %12, %cst_12 {dimension_numbers = #tpu.dot_dimension_numbers<[1], [0], [0], [1], [0, 0, 1, 1], [], []>} : vector<1x32xf32>, vector<32x128xf32>, vector<1x128xf32> -> vector<1x128xf32>
    %c0_13 = arith.constant 0 : index
    %c0_14 = arith.constant 0 : index
    %15 = vector.load %arg7[%c0_13, %c0_14] : memref<1x1xf32, #tpu.memory_space<vmem>>, vector<1x1xf32>
    %16 = vector.broadcast %15 : vector<1x1xf32> to vector<1x128xf32>
    %17 = arith.addf %14, %16 : vector<1x128xf32>
    %c0_15 = arith.constant 0 : index
    %c0_16 = arith.constant 0 : index
    %18 = vector.load %arg8[%c0_15, %c0_16] : memref<1x128xf32, #tpu.memory_space<vmem>>, vector<1x128xf32>
    tpu.vector_store %arg8[%c0_15, %c0_16], %17 {strides = array<i32>} : memref<1x128xf32, #tpu.memory_space<vmem>>, vector<1x128xf32>,
    return
  }
  func.func @transform_0(%arg0: i32) -> (i32, i32) {
    %c0_i32 = arith.constant 0 : i32
    %c0_i32_0 = arith.constant 0 : i32
    return %arg0, %c0_i32 : i32, i32
  }
  func.func @transform_1(%arg0: i32) -> (i32, i32) {
    %c0_i32 = arith.constant 0 : i32
    %c0_i32_0 = arith.constant 0 : i32
    %c0_i32_1 = arith.constant 0 : i32
    return %c0_i32, %c0_i32_0 : i32, i32
  }
  func.func @transform_2(%arg0: i32) -> (i32, i32) {
    %c0_i32 = arith.constant 0 : i32
    %c0_i32_0 = arith.constant 0 : i32
    %c0_i32_1 = arith.constant 0 : i32
    return %c0_i32, %c0_i32_0 : i32, i32
  }
  func.func @transform_3(%arg0: i32) -> (i32, i32) {
    %c0_i32 = arith.constant 0 : i32
    %c0_i32_0 = arith.constant 0 : i32
    %c0_i32_1 = arith.constant 0 : i32
    return %c0_i32, %c0_i32_0 : i32, i32
  }
  func.func @transform_4(%arg0: i32) -> (i32, i32) {
    %c0_i32 = arith.constant 0 : i32
    %c0_i32_0 = arith.constant 0 : i32
    %c0_i32_1 = arith.constant 0 : i32
    return %c0_i32, %c0_i32_0 : i32, i32
  }
  func.func @transform_5(%arg0: i32) -> (i32, i32) {
    %c0_i32 = arith.constant 0 : i32
    %c0_i32_0 = arith.constant 0 : i32
    %c0_i32_1 = arith.constant 0 : i32
    return %c0_i32, %c0_i32_0 : i32, i32
  }
  func.func @transform_6(%arg0: i32) -> (i32, i32) {
    %c0_i32 = arith.constant 0 : i32
    %c0_i32_0 = arith.constant 0 : i32
    %c0_i32_1 = arith.constant 0 : i32
    return %c0_i32, %c0_i32_0 : i32, i32
  }
  func.func @transform_7(%arg0: i32) -> (i32, i32) {
    %c0_i32 = arith.constant 0 : i32
    %c0_i32_0 = arith.constant 0 : i32
    return %c0_i32, %arg0 : i32, i32
  }
}

</mosaic_0001>

<llo_original>
// kernel: mlp_critic_forward.1
$region0: #{mlp_critic_forward.1}
  #allocation0 [shape = 'u32[]', space=smem, size = 0x4, offset = 0x4, fixed_abs, tag = 'smem constant byte address 0x4 - core index']
  #allocation1 [shape = 'u32[144,128]{1,0:T(1,128)}', space=vmem, size = 0x12000, scoped, tag = 'internal scratch']
  #allocation2 [shape = 'f32[1,1]{1,0:T(1,128)S(1)}', space=vmem, size = 0x200, scoped, tag = 'scoped memory for mlp_critic_forward.1']
  %s0 = inlined_call_operand.vmem [shape: f32[128,16], index: 0, kind: input, shape index: {}]
  %s1 = inlined_call_operand.vmem [shape: f32[32,16], index: 1, kind: input, shape index: {}]
  %s2 = inlined_call_operand.vmem [shape: f32[32,1], index: 2, kind: input, shape index: {}]
  %s3 = inlined_call_operand.vmem [shape: f32[32,32], index: 3, kind: input, shape index: {}]
  %s4 = inlined_call_operand.vmem [shape: f32[32,1], index: 4, kind: input, shape index: {}]
  %s5 = inlined_call_operand.vmem [shape: f32[1,32], index: 5, kind: input, shape index: {}]
  %s6 = inlined_call_operand.<no memory space> [shape: f32[1,1], index: 6, kind: input, shape index: {}]
  %s7 = inlined_call_operand.vmem [shape: f32[1,128], index: 7, kind: output, shape index: {}]
  %s8 = sld [smem:[#allocation0]]
  $region38: #{mlp_critic_forward.1} parent=0
    _
  %s10 = ssub.s32 1, %s8
  %s11 = scalar_select 0, %s10, %s8
  %v12 = vstv %s6
  %13 = vst [vmem:[#allocation2] sm:$0x1] %v12
  // Predicated region
  $region2: #{mlp_critic_forward.1} parent=0 // pred_check
    _
  $region3: #{mlp_critic_forward.1} parent=0 // pred_check_branch
    %15 = sbr.rel (0) target = $region5
  $region4: #{mlp_critic_forward.1} parent=0 // pred_region
    _
  $region5: #{mlp_critic_forward.1} parent=0 // pred_fallthru
    _
  // Predicated region
  $region6: #{mlp_critic_forward.1} parent=0 // pred_check
    _
  $region7: #{mlp_critic_forward.1} parent=0 // pred_check_branch
    %17 = sbr.rel (0) target = $region9
  $region8: #{mlp_critic_forward.1} parent=0 // pred_region
    _
  $region9: #{mlp_critic_forward.1} parent=0 // pred_fallthru
    _
  // Predicated region
  $region10: #{mlp_critic_forward.1} parent=0 // pred_check
    _
  $region11: #{mlp_critic_forward.1} parent=0 // pred_check_branch
    %19 = sbr.rel (0) target = $region13
  $region12: #{mlp_critic_forward.1} parent=0 // pred_region
    _
  $region13: #{mlp_critic_forward.1} parent=0 // pred_fallthru
    _
  // Predicated region
  $region14: #{mlp_critic_forward.1} parent=0 // pred_check
    _
  $region15: #{mlp_critic_forward.1} parent=0 // pred_check_branch
    %21 = sbr.rel (0) target = $region17
  $region16: #{mlp_critic_forward.1} parent=0 // pred_region
    _
  $region17: #{mlp_critic_forward.1} parent=0 // pred_fallthru
    _
  // Predicated region
  $region18: #{mlp_critic_forward.1} parent=0 // pred_check
    _
  $region19: #{mlp_critic_forward.1} parent=0 // pred_check_branch
    %23 = sbr.rel (0) target = $region21
  $region20: #{mlp_critic_forward.1} parent=0 // pred_region
    _
  $region21: #{mlp_critic_forward.1} parent=0 // pred_fallthru
    _
  // Predicated region
  $region22: #{mlp_critic_forward.1} parent=0 // pred_check
    _
  $region23: #{mlp_critic_forward.1} parent=0 // pred_check_branch
    %25 = sbr.rel (0) target = $region25
  $region24: #{mlp_critic_forward.1} parent=0 // pred_region
    _
  $region25: #{mlp_critic_forward.1} parent=0 // pred_fallthru
    _
  // Predicated region
  $region26: #{mlp_critic_forward.1} parent=0 // pred_check
    _
  $region27: #{mlp_critic_forward.1} parent=0 // pred_check_branch
    %27 = sbr.rel (0) target = $region29
  $region28: #{mlp_critic_forward.1} parent=0 // pred_region
    _
  $region29: #{mlp_critic_forward.1} parent=0 // pred_fallthru
    _
  %v28 = vld [vmem:[%s1] sm:$0xff]
  %v29 = vld [vmem:[%s1 + $0x8] sm:$0xff]
  %v30 = vld [vmem:[%s1 + $0x10] sm:$0xff]
  %v31 = vld [vmem:[%s1 + $0x18] sm:$0xff]
  %v32 = vld [vmem:[%s0] sm:$0xff]
  %v33 = vld [vmem:[%s0 + $0x8] sm:$0xff]
  %v34 = vld [vmem:[%s0 + $0x10] sm:$0xff]
  %v35 = vld [vmem:[%s0 + $0x18] sm:$0xff]
  %v36 = vld [vmem:[%s0 + $0x20] sm:$0xff]
  %v37 = vld [vmem:[%s0 + $0x28] sm:$0xff]
  %v38 = vld [vmem:[%s0 + $0x30] sm:$0xff]
  %v39 = vld [vmem:[%s0 + $0x38] sm:$0xff]
  %v40 = vld [vmem:[%s0 + $0x40] sm:$0xff]
  %v41 = vld [vmem:[%s0 + $0x48] sm:$0xff]
  %v42 = vld [vmem:[%s0 + $0x50] sm:$0xff]
  %v43 = vld [vmem:[%s0 + $0x58] sm:$0xff]
  %v44 = vld [vmem:[%s0 + $0x60] sm:$0xff]
  %v45 = vld [vmem:[%s0 + $0x68] sm:$0xff]
  %v46 = vld [vmem:[%s0 + $0x70] sm:$0xff]
  %v47 = vld [vmem:[%s0 + $0x78] sm:$0xff]
  %v48 = vld [vmem:[%s2] sm:$0xff]
  %v49 = vld [vmem:[%s2 + $0x8] sm:$0xff]
  %v50 = vld [vmem:[%s2 + $0x10] sm:$0xff]
  %v51 = vld [vmem:[%s2 + $0x18] sm:$0xff]
  %53 = vset.pattern.permute.xlu0 0
  %54 = vperm.xlu0 %53, %v48
  %v55 = vpop.permute.xlu0 %54
  %58 = vset.pattern.permute.xlu0 0
  %59 = vperm.xlu0 %58, %v49
  %v60 = vpop.permute.xlu0 %59
  %63 = vset.pattern.permute.xlu0 0
  %64 = vperm.xlu0 %63, %v50
  %v65 = vpop.permute.xlu0 %64
  %68 = vset.pattern.permute.xlu0 0
  %69 = vperm.xlu0 %68, %v51
  %v70 = vpop.permute.xlu0 %69
  %vm72 = vcmask 130048
  %v74 = vsel %vm72, %v28, 0
  %v77 = vsel %vm72, %v29, 0
  %v80 = vsel %vm72, %v30, 0
  %v83 = vsel %vm72, %v31, 0
  %v86 = vsel %vm72, %v32, 0
  %v89 = vsel %vm72, %v33, 0
  %v92 = vsel %vm72, %v34, 0
  %v95 = vsel %vm72, %v35, 0
  %v98 = vsel %vm72, %v36, 0
  %v101 = vsel %vm72, %v37, 0
  %v104 = vsel %vm72, %v38, 0
  %v107 = vsel %vm72, %v39, 0
  %v110 = vsel %vm72, %v40, 0
  %v113 = vsel %vm72, %v41, 0
  %v116 = vsel %vm72, %v42, 0
  %v119 = vsel %vm72, %v43, 0
  %v122 = vsel %vm72, %v44, 0
  %v125 = vsel %vm72, %v45, 0
  %v128 = vsel %vm72, %v46, 0
  %v131 = vsel %vm72, %v47, 0
  %133 = vmatprep.subr.mxu0 0.0
  %134 = vmatpush1.xpose.msra.mxu0 %v86
  %135 = vmatprep.subr.mxu0 0.0
  %136 = vmatpush1.xpose.msra.mxu0 %v89
  %137 = vmatprep.subr.mxu0 0.0
  %138 = vmatpush1.xpose.msra.mxu0 %v92
  %139 = vmatprep.subr.mxu0 0.0
  %140 = vmatpush1.xpose.msra.mxu0 %v95
  %141 = vmatprep.subr.mxu0 0.0
  %142 = vmatpush1.xpose.msra.mxu0 %v98
  %143 = vmatprep.subr.mxu0 0.0
  %144 = vmatpush1.xpose.msra.mxu0 %v101
  %145 = vmatprep.subr.mxu0 0.0
  %146 = vmatpush1.xpose.msra.mxu0 %v104
  %147 = vmatprep.subr.mxu0 0.0
  %148 = vmatpush1.xpose.msra.mxu0 %v107
  %149 = vmatprep.subr.mxu0 0.0
  %150 = vmatpush1.xpose.msra.mxu0 %v110
  %151 = vmatprep.subr.mxu0 0.0
  %152 = vmatpush1.xpose.msra.mxu0 %v113
  %153 = vmatprep.subr.mxu0 0.0
  %154 = vmatpush1.xpose.msra.mxu0 %v116
  %155 = vmatprep.subr.mxu0 0.0
  %156 = vmatpush1.xpose.msra.mxu0 %v119
  %157 = vmatprep.subr.mxu0 0.0
  %158 = vmatpush1.xpose.msra.mxu0 %v122
  %159 = vmatprep.subr.mxu0 0.0
  %160 = vmatpush1.xpose.msra.mxu0 %v125
  %161 = vmatprep.subr.mxu0 0.0
  %162 = vmatpush1.xpose.msra.mxu0 %v128
  %163 = vmatprep.subr.mxu0 0.0
  %164 = vmatpush1.xpose.msra.mxu0 %v131
  %165 = vmatprep.subr.mxu0 0.0
  %166 = vmatpush1.xpose.msra.mxu0 0.0
  %167 = vmatprep.subr.mxu0 0.0
  %168 = vmatpush1.xpose.msra.mxu0 0.0
  %169 = vmatprep.subr.mxu0 0.0
  %170 = vmatpush1.xpose.msra.mxu0 0.0
  %171 = vmatprep.subr.mxu0 0.0
  %172 = vmatpush1.xpose.msra.mxu0 0.0
  %173 = vmatprep.subr.mxu0 0.0
  %174 = vmatpush1.xpose.msra.mxu0 0.0
  %175 = vmatprep.subr.mxu0 0.0
  %176 = vmatpush1.xpose.msra.mxu0 0.0
  %177 = vmatprep.subr.mxu0 0.0
  %178 = vmatpush1.xpose.msra.mxu0 0.0
  %179 = vmatprep.subr.mxu0 0.0
  %180 = vmatpush1.xpose.msra.mxu0 0.0
  %181 = vmatprep.subr.mxu0 0.0
  %182 = vmatpush1.xpose.msra.mxu0 0.0
  %183 = vmatprep.subr.mxu0 0.0
  %184 = vmatpush1.xpose.msra.mxu0 0.0
  %185 = vmatprep.subr.mxu0 0.0
  %186 = vmatpush1.xpose.msra.mxu0 0.0
  %187 = vmatprep.subr.mxu0 0.0
  %188 = vmatpush1.xpose.msra.mxu0 0.0
  %189 = vmatprep.subr.mxu0 0.0
  %190 = vmatpush1.xpose.msra.mxu0 0.0
  %191 = vmatprep.subr.mxu0 0.0
  %192 = vmatpush1.xpose.msra.mxu0 0.0
  %193 = vmatprep.subr.mxu0 0.0
  %194 = vmatpush1.xpose.msra.mxu0 0.0
  %195 = vmatprep.subr.mxu0 0.0
  %196 = vmatpush1.xpose.msra.mxu0 0.0
  %197 = vmatprep.mubr.f32.mxu0 0.0
  %198 = vmatmul.mubr.f32.gmra.mrb[0].mxu0 %v74
  %v199 = vpop.f32.mrb[0].mxu0
  %v200 = vadd.f32 %v55, %v199
  %v201 = vpop.f32.mrb[0].mxu0
  %202 = vmatprep.mubr.f32.mxu0 0.0
  %203 = vmatmul.mubr.f32.gmra.mrb[0].mxu0 %v77
  %v204 = vpop.f32.mrb[0].mxu0
  %v205 = vadd.f32 %v60, %v204
  %v206 = vpop.f32.mrb[0].mxu0
  %207 = vmatprep.mubr.f32.mxu0 0.0
  %208 = vmatmul.mubr.f32.gmra.mrb[0].mxu0 %v80
  %v209 = vpop.f32.mrb[0].mxu0
  %v210 = vadd.f32 %v65, %v209
  %v211 = vpop.f32.mrb[0].mxu0
  %212 = vmatprep.mubr.f32.mxu0 0.0
  %213 = vmatmul.mubr.f32.gmra.mrb[0].mxu0 %v83
  %v214 = vpop.f32.mrb[0].mxu0
  %v215 = vadd.f32 %v70, %v214
  %v216 = vpop.f32.mrb[0].mxu0
  %217 = vdwg.mxu0
  %v218 = vtanh.pop %v200
  %v219 = vtanh.pop %v205
  %v220 = vtanh.pop %v210
  %v221 = vtanh.pop %v215
  %v222 = vld [vmem:[%s3] sm:$0xff]
  %v223 = vld [vmem:[%s3 + $0x8] sm:$0xff]
  %v224 = vld [vmem:[%s3 + $0x10] sm:$0xff]
  %v225 = vld [vmem:[%s3 + $0x18] sm:$0xff]
  %v226 = vld [vmem:[%s4] sm:$0xff]
  %v227 = vld [vmem:[%s4 + $0x8] sm:$0xff]
  %v228 = vld [vmem:[%s4 + $0x10] sm:$0xff]
  %v229 = vld [vmem:[%s4 + $0x18] sm:$0xff]
  %231 = vset.pattern.permute.xlu0 0
  %232 = vperm.xlu0 %231, %v226
  %v233 = vpop.permute.xlu0 %232
  %236 = vset.pattern.permute.xlu0 0
  %237 = vperm.xlu0 %236, %v227
  %v238 = vpop.permute.xlu0 %237
  %241 = vset.pattern.permute.xlu0 0
  %242 = vperm.xlu0 %241, %v228
  %v243 = vpop.permute.xlu0 %242
  %246 = vset.pattern.permute.xlu0 0
  %247 = vperm.xlu0 %246, %v229
  %v248 = vpop.permute.xlu0 %247
  %vm250 = vcmask 261120
  %v252 = vsel %vm250, %v222, 0
  %v255 = vsel %vm250, %v223, 0
  %v258 = vsel %vm250, %v224, 0
  %v261 = vsel %vm250, %v225, 0
  %263 = vmatprep.subr.mxu0 0.0
  %264 = vmatpush1.msra.mxu0 %v218
  %265 = vmatprep.subr.mxu0 0.0
  %266 = vmatpush1.msra.mxu0 %v219
  %267 = vmatprep.subr.mxu0 0.0
  %268 = vmatpush1.msra.mxu0 %v220
  %269 = vmatprep.subr.mxu0 0.0
  %270 = vmatpush1.msra.mxu0 %v221
  %271 = vmatprep.subr.mxu0 0.0
  %272 = vmatpush1.msra.mxu0 0.0
  %273 = vmatprep.subr.mxu0 0.0
  %274 = vmatpush1.msra.mxu0 0.0
  %275 = vmatprep.subr.mxu0 0.0
  %276 = vmatpush1.msra.mxu0 0.0
  %277 = vmatprep.subr.mxu0 0.0
  %278 = vmatpush1.msra.mxu0 0.0
  %279 = vmatprep.subr.mxu0 0.0
  %280 = vmatpush1.msra.mxu0 0.0
  %281 = vmatprep.subr.mxu0 0.0
  %282 = vmatpush1.msra.mxu0 0.0
  %283 = vmatprep.subr.mxu0 0.0
  %284 = vmatpush1.msra.mxu0 0.0
  %285 = vmatprep.subr.mxu0 0.0
  %286 = vmatpush1.msra.mxu0 0.0
  %287 = vmatprep.subr.mxu0 0.0
  %288 = vmatpush1.msra.mxu0 0.0
  %289 = vmatprep.subr.mxu0 0.0
  %290 = vmatpush1.msra.mxu0 0.0
  %291 = vmatprep.subr.mxu0 0.0
  %292 = vmatpush1.msra.mxu0 0.0
  %293 = vmatprep.subr.mxu0 0.0
  %294 = vmatpush1.msra.mxu0 0.0
  %295 = vmatprep.subr.mxu0 0.0
  %296 = vmatpush1.msra.mxu0 0.0
  %297 = vmatprep.subr.mxu0 0.0
  %298 = vmatpush1.msra.mxu0 0.0
  %299 = vmatprep.subr.mxu0 0.0
  %300 = vmatpush1.msra.mxu0 0.0
  %301 = vmatprep.subr.mxu0 0.0
  %302 = vmatpush1.msra.mxu0 0.0
  %303 = vmatprep.subr.mxu0 0.0
  %304 = vmatpush1.msra.mxu0 0.0
  %305 = vmatprep.subr.mxu0 0.0
  %306 = vmatpush1.msra.mxu0 0.0
  %307 = vmatprep.subr.mxu0 0.0
  %308 = vmatpush1.msra.mxu0 0.0
  %309 = vmatprep.subr.mxu0 0.0
  %310 = vmatpush1.msra.mxu0 0.0
  %311 = vmatprep.subr.mxu0 0.0
  %312 = vmatpush1.msra.mxu0 0.0
  %313 = vmatprep.subr.mxu0 0.0
  %314 = vmatpush1.msra.mxu0 0.0
  %315 = vmatprep.subr.mxu0 0.0
  %316 = vmatpush1.msra.mxu0 0.0
  %317 = vmatprep.subr.mxu0 0.0
  %318 = vmatpush1.msra.mxu0 0.0
  %319 = vmatprep.subr.mxu0 0.0
  %320 = vmatpush1.msra.mxu0 0.0
  %321 = vmatprep.subr.mxu0 0.0
  %322 = vmatpush1.msra.mxu0 0.0
  %323 = vmatprep.subr.mxu0 0.0
  %324 = vmatpush1.msra.mxu0 0.0
  %325 = vmatprep.subr.mxu0 0.0
  %326 = vmatpush1.msra.mxu0 0.0
  %327 = vmatprep.mubr.f32.mxu0 0.0
  %328 = vmatmul.mubr.f32.gmra.mrb[0].mxu0 %v252
  %v329 = vpop.f32.mrb[0].mxu0
  %v330 = vadd.f32 %v233, %v329
  %v331 = vpop.f32.mrb[0].mxu0
  %332 = vmatprep.mubr.f32.mxu0 0.0
  %333 = vmatmul.mubr.f32.gmra.mrb[0].mxu0 %v255
  %v334 = vpop.f32.mrb[0].mxu0
  %v335 = vadd.f32 %v238, %v334
  %v336 = vpop.f32.mrb[0].mxu0
  %337 = vmatprep.mubr.f32.mxu0 0.0
  %338 = vmatmul.mubr.f32.gmra.mrb[0].mxu0 %v258
  %v339 = vpop.f32.mrb[0].mxu0
  %v340 = vadd.f32 %v243, %v339
  %v341 = vpop.f32.mrb[0].mxu0
  %342 = vmatprep.mubr.f32.mxu0 0.0
  %343 = vmatmul.mubr.f32.gmra.mrb[0].mxu0 %v261
  %v344 = vpop.f32.mrb[0].mxu0
  %v345 = vadd.f32 %v248, %v344
  %v346 = vpop.f32.mrb[0].mxu0
  %347 = vdwg.mxu0
  %v348 = vtanh.pop %v330
  %v349 = vtanh.pop %v335
  %v350 = vtanh.pop %v340
  %v351 = vtanh.pop %v345
  %v352 = vld [vmem:[%s5] sm:$0x1]
  %v353 = vld [vmem:[#allocation2] sm:$0x1]
  %355 = vset.pattern.permute.xlu0 0
  %356 = vperm.xlu0 %355, %v353
  %v357 = vpop.permute.xlu0 %356
  %v359 = vlaneseq
  %v360 = vshrl.u32 %v359, 7
  %v361 = vsub.s32 0, %v360
  %v362 = vrot.slane %v357, %v361
  %v364 = vsel %vm250, %v352, 0
  %366 = vmatprep.subr.mxu0 0.0
  %367 = vmatpush1.msra.mxu0 %v348
  %368 = vmatprep.subr.mxu0 0.0
  %369 = vmatpush1.msra.mxu0 %v349
  %370 = vmatprep.subr.mxu0 0.0
  %371 = vmatpush1.msra.mxu0 %v350
  %372 = vmatprep.subr.mxu0 0.0
  %373 = vmatpush1.msra.mxu0 %v351
  %374 = vmatprep.subr.mxu0 0.0
  %375 = vmatpush1.msra.mxu0 0.0
  %376 = vmatprep.subr.mxu0 0.0
  %377 = vmatpush1.msra.mxu0 0.0
  %378 = vmatprep.subr.mxu0 0.0
  %379 = vmatpush1.msra.mxu0 0.0
  %380 = vmatprep.subr.mxu0 0.0
  %381 = vmatpush1.msra.mxu0 0.0
  %382 = vmatprep.subr.mxu0 0.0
  %383 = vmatpush1.msra.mxu0 0.0
  %384 = vmatprep.subr.mxu0 0.0
  %385 = vmatpush1.msra.mxu0 0.0
  %386 = vmatprep.subr.mxu0 0.0
  %387 = vmatpush1.msra.mxu0 0.0
  %388 = vmatprep.subr.mxu0 0.0
  %389 = vmatpush1.msra.mxu0 0.0
  %390 = vmatprep.subr.mxu0 0.0
  %391 = vmatpush1.msra.mxu0 0.0
  %392 = vmatprep.subr.mxu0 0.0
  %393 = vmatpush1.msra.mxu0 0.0
  %394 = vmatprep.subr.mxu0 0.0
  %395 = vmatpush1.msra.mxu0 0.0
  %396 = vmatprep.subr.mxu0 0.0
  %397 = vmatpush1.msra.mxu0 0.0
  %398 = vmatprep.subr.mxu0 0.0
  %399 = vmatpush1.msra.mxu0 0.0
  %400 = vmatprep.subr.mxu0 0.0
  %401 = vmatpush1.msra.mxu0 0.0
  %402 = vmatprep.subr.mxu0 0.0
  %403 = vmatpush1.msra.mxu0 0.0
  %404 = vmatprep.subr.mxu0 0.0
  %405 = vmatpush1.msra.mxu0 0.0
  %406 = vmatprep.subr.mxu0 0.0
  %407 = vmatpush1.msra.mxu0 0.0
  %408 = vmatprep.subr.mxu0 0.0
  %409 = vmatpush1.msra.mxu0 0.0
  %410 = vmatprep.subr.mxu0 0.0
  %411 = vmatpush1.msra.mxu0 0.0
  %412 = vmatprep.subr.mxu0 0.0
  %413 = vmatpush1.msra.mxu0 0.0
  %414 = vmatprep.subr.mxu0 0.0
  %415 = vmatpush1.msra.mxu0 0.0
  %416 = vmatprep.subr.mxu0 0.0
  %417 = vmatpush1.msra.mxu0 0.0
  %418 = vmatprep.subr.mxu0 0.0
  %419 = vmatpush1.msra.mxu0 0.0
  %420 = vmatprep.subr.mxu0 0.0
  %421 = vmatpush1.msra.mxu0 0.0
  %422 = vmatprep.subr.mxu0 0.0
  %423 = vmatpush1.msra.mxu0 0.0
  %424 = vmatprep.subr.mxu0 0.0
  %425 = vmatpush1.msra.mxu0 0.0
  %426 = vmatprep.subr.mxu0 0.0
  %427 = vmatpush1.msra.mxu0 0.0
  %428 = vmatprep.subr.mxu0 0.0
  %429 = vmatpush1.msra.mxu0 0.0
  %430 = vmatprep.mubr.f32.mxu0 0.0
  %431 = vmatmul.mubr.f32.gmra.mrb[0].mxu0 %v364
  %v432 = vpop.f32.mrb[0].mxu0
  %v433 = vadd.f32 %v362, %v432
  %v434 = vpop.f32.mrb[0].mxu0
  %435 = vdwg.mxu0
  %436 = vst [vmem:[%s7] sm:$0x1] %v433
  // Predicated region
  $region30: #{mlp_critic_forward.1} parent=0 // pred_check
    _
  $region31: #{mlp_critic_forward.1} parent=0 // pred_check_branch
    %438 = sbr.rel (0) target = $region33
  $region32: #{mlp_critic_forward.1} parent=0 // pred_region
    _
  $region33: #{mlp_critic_forward.1} parent=0 // pred_fallthru
    _
  // Predicated region
  $region34: #{mlp_critic_forward.1} parent=0 // pred_check
    _
  $region35: #{mlp_critic_forward.1} parent=0 // pred_check_branch
    %440 = sbr.rel (0) target = $region37
  $region36: #{mlp_critic_forward.1} parent=0 // pred_region
    _
  $region37: #{mlp_critic_forward.1} parent=0 // pred_fallthru
    _

</llo_original>
